<compile_context>
chip_gen: v5e
topology: v5e:2x2
jax: 0.10.0
libtpu: 0.0.40
codegen_flags: <defaults>
</compile_context>

<pallas_src>
import jax
import jax.numpy as jnp
from jax.experimental import pallas as pl
from jax.experimental.pallas import tpu as pltpu

# ----- constants from the PyTorch module -------------------------------------
MHC_SEQ_LEN = 34
N_FEATURES = 21
N_FILTERS = 20
N_HID = 60
PEP_LEN = 15
K_W = 9                          # conv kernel width (height 21 covers all features)
N_WIN = PEP_LEN - K_W + 1        # = 7 conv positions (== MaxPool2d((1,7)) extent)
BN2_EPS = 1.0                    # nn.BatchNorm2d(N_FILTERS, 1) -> eps = 1
BN1_EPS = 1e-5                   # nn.BatchNorm1d(2*N_HID) default eps
PATCH_DIM = N_FEATURES * K_W     # 189
PEP_POS_DIM = N_FEATURES * PEP_LEN   # 315, (position, feature) flatten
MHC_DIM = N_FEATURES * MHC_SEQ_LEN   # 714


# ----- Pallas kernel ----------------------------------------------------------
def cnn_kernel(pep_ref, mhc_ref, wconv_ref, wp_ref, wm_ref, consts_ref,
               out_ref, patch_ref):
    tb = pep_ref.shape[0]

    # --- in-kernel im2col: 7 overlapping 189-wide lane windows ---------------
    # window w covers positions [w, w+9) -> lanes [21*w, 21*w + 189)
    for w in range(N_WIN):                                   # static loop
        patch_ref[pl.ds(w * tb, tb), :] = pep_ref[:, pl.ds(w * N_FEATURES,
                                                           PATCH_DIM)]

    # --- conv as ONE (7*TB, 189)@(189, 20) matmul (BN2 scale folded in) ------
    conv = jnp.dot(patch_ref[...], wconv_ref[...],
                   preferred_element_type=jnp.float32)        # (7*TB, 20) f32

    # MaxPool over the 7 window positions.  The folded (bias+BN2) shift is
    # window-independent and ReLU is monotone, so max/shift/ReLU commute and
    # shift+ReLU are applied once to the (TB, 20) max instead of 7 times.
    feat = conv[0:tb, :]
    for w in range(1, N_WIN):
        feat = jnp.maximum(feat, conv[w * tb:(w + 1) * tb, :])
    shift2 = consts_ref[0:1, 0:N_FILTERS]                     # bconv+BN2 folded
    feat = jnp.maximum(feat + shift2, 0.0)                    # (TB, 20) f32

    # --- dense_p / dense_m with BatchNorm1d + biases folded in ---------------
    hp = jnp.dot(feat.astype(jnp.bfloat16), wp_ref[...],
                 preferred_element_type=jnp.float32) + consts_ref[1:2, 0:N_HID]
    hm = jnp.dot(mhc_ref[...], wm_ref[...],
                 preferred_element_type=jnp.float32) + consts_ref[2:3, 0:N_HID]
    hp = jnp.maximum(hp, 0.0)                                 # (TB, 60) f32
    hm = jnp.maximum(hm, 0.0)                                 # (TB, 60) f32
    # dropout(p=0.5): identity in eval mode.
    # TODO(synk): training-mode stochastic dropout mask not implemented.

    # --- dense_all(120 -> 1) as VPU multiply + lane reduction, then sigmoid --
    wall_p = consts_ref[3:4, 0:N_HID]
    wall_m = consts_ref[4:5, 0:N_HID]
    ball = consts_ref[5:6, 0:1]
    logits = jnp.sum(hp * wall_p + hm * wall_m, axis=-1, keepdims=True) + ball
    out_ref[...] = jax.nn.sigmoid(logits)                     # (TB, 1)


# ----- wrapper: layout prep, BN/bias folding, batch grid ----------------------
def cnn_forward(x, params, *, block_b=512):
    B = x.shape[0]
    x = x.astype(jnp.float32)

    # pep in (position, feature) order -> lane-dense (B, 315); mhc -> (B, 714)
    pep = jnp.transpose(x[:, :, :PEP_LEN], (0, 2, 1)).reshape(B, PEP_POS_DIM)
    mhc = x[:, :, PEP_LEN:].reshape(B, MHC_DIM)   # row-major, matches torch .view

    # --- fold BatchNorms (eval mode) and biases into weights / shifts --------
    s2 = params["bn2_gamma"] / jnp.sqrt(params["bn2_var"] + BN2_EPS)
    shift2 = s2 * (params["bconv"] - params["bn2_mean"]) + params["bn2_beta"]

    s1 = params["bn1_gamma"] / jnp.sqrt(params["bn1_var"] + BN1_EPS)
    t1 = params["bn1_beta"] - params["bn1_mean"] * s1
    shift_p = params["bp"] * s1[:N_HID] + t1[:N_HID]
    shift_m = params["bm"] * s1[N_HID:] + t1[N_HID:]

    # conv weight flattened in (k, c) order to match (position, feature) pep
    wconv_kc = jnp.transpose(params["wconv"], (0, 2, 1)).reshape(N_FILTERS,
                                                                 PATCH_DIM)
    wconv_s = (wconv_kc.T * s2[None, :]).astype(jnp.bfloat16)          # (189, 20)
    wp_s = (params["wp"].T * s1[None, :N_HID]).astype(jnp.bfloat16)    # (20, 60)
    wm_s = (params["wm"].T * s1[None, N_HID:]).astype(jnp.bfloat16)    # (714, 60)

    # pack every remaining small vector into one (8, 128) f32 slab
    consts = jnp.zeros((8, 128), jnp.float32)
    consts = consts.at[0, :N_FILTERS].set(shift2)
    consts = consts.at[1, :N_HID].set(shift_p)
    consts = consts.at[2, :N_HID].set(shift_m)
    consts = consts.at[3, :N_HID].set(params["wall"][0, :N_HID])
    consts = consts.at[4, :N_HID].set(params["wall"][0, N_HID:])
    consts = consts.at[5, 0].set(params["ball"][0])

    # --- batch tiling (rows padded to multiples of 16 for bf16 sublane tiles)
    b16 = ((B + 15) // 16) * 16
    tb = min(block_b, b16)
    b_pad = ((B + tb - 1) // tb) * tb
    pep_b = jnp.pad(pep, ((0, b_pad - B), (0, 0))).astype(jnp.bfloat16)
    mhc_b = jnp.pad(mhc, ((0, b_pad - B), (0, 0))).astype(jnp.bfloat16)

    out = pl.pallas_call(
        cnn_kernel,
        out_shape=jax.ShapeDtypeStruct((b_pad, 1), jnp.float32),
        grid_spec=pltpu.PrefetchScalarGridSpec(
            num_scalar_prefetch=0,
            grid=(b_pad // tb,),
            in_specs=[
                pl.BlockSpec((tb, PEP_POS_DIM), lambda i: (i, 0)),       # pep
                pl.BlockSpec((tb, MHC_DIM), lambda i: (i, 0)),           # mhc
                pl.BlockSpec((PATCH_DIM, N_FILTERS), lambda i: (0, 0)),  # wconv
                pl.BlockSpec((N_FILTERS, N_HID), lambda i: (0, 0)),      # wp
                pl.BlockSpec((MHC_DIM, N_HID), lambda i: (0, 0)),        # wm
                pl.BlockSpec((8, 128), lambda i: (0, 0)),                # consts
            ],
            out_specs=pl.BlockSpec((tb, 1), lambda i: (i, 0)),
            scratch_shapes=[pltpu.VMEM((N_WIN * tb, PATCH_DIM), jnp.bfloat16)],
        ),
        compiler_params=pltpu.CompilerParams(
            dimension_semantics=("parallel",)),
    )(pep_b, mhc_b, wconv_s, wp_s, wm_s, consts)
    return out[:B]


# ----- deterministic parameter init (synthetic, not a checkpoint) ------------
def init_params(key):
    ks = jax.random.split(key, 16)
    f32 = jnp.float32

    def nrm(k, shape, scale=0.1):
        return (scale * jax.random.normal(k, shape)).astype(f32)

    return dict(
        wconv=nrm(ks[0], (N_FILTERS, N_FEATURES, K_W)),     # torch (20,1,21,9) squeezed
        bconv=nrm(ks[1], (N_FILTERS,)),
        bn2_gamma=(1.0 + 0.1 * jax.random.normal(ks[2], (N_FILTERS,))).astype(f32),
        bn2_beta=nrm(ks[3], (N_FILTERS,)),
        bn2_mean=nrm(ks[4], (N_FILTERS,)),
        bn2_var=jax.random.uniform(ks[5], (N_FILTERS,), f32, 0.5, 1.5),
        wp=nrm(ks[6], (N_HID, N_FILTERS)),                  # torch Linear(20 -> 60)
        bp=nrm(ks[7], (N_HID,)),
        wm=nrm(ks[8], (N_HID, MHC_DIM), 0.05),              # torch Linear(714 -> 60)
        bm=nrm(ks[9], (N_HID,)),
        bn1_gamma=(1.0 + 0.1 * jax.random.normal(ks[10], (2 * N_HID,))).astype(f32),
        bn1_beta=nrm(ks[11], (2 * N_HID,)),
        bn1_mean=nrm(ks[12], (2 * N_HID,)),
        bn1_var=jax.random.uniform(ks[13], (2 * N_HID,), f32, 0.5, 1.5),
        wall=nrm(ks[14], (1, 2 * N_HID)),                   # torch Linear(120 -> 1)
        ball=nrm(ks[15], (1,)),
    )


# ----- pure-JAX reference (mirrors the PyTorch forward, eval mode, f32) ------
def reference_forward(x, p):
    B = x.shape[0]
    pep = x[:, :, :PEP_LEN]
    mhc = x[:, :, PEP_LEN:].reshape(B, MHC_DIM)
    patches = jnp.stack([pep[:, :, w:w + K_W] for w in range(N_WIN)], axis=1)  # (B,7,21,9)
    conv = jnp.einsum("bwck,fck->bwf", patches, p["wconv"]) + p["bconv"]       # (B,7,20)
    s2 = p["bn2_gamma"] / jnp.sqrt(p["bn2_var"] + BN2_EPS)
    conv = conv * s2 + (p["bn2_beta"] - p["bn2_mean"] * s2)
    feat = jnp.max(jnp.maximum(conv, 0.0), axis=1)                             # (B,20)
    out_p = feat @ p["wp"].T + p["bp"]
    out_m = mhc @ p["wm"].T + p["bm"]
    out_all = jnp.concatenate([out_p, out_m], axis=1)                          # (B,120)
    s1 = p["bn1_gamma"] / jnp.sqrt(p["bn1_var"] + BN1_EPS)
    out_all = out_all * s1 + (p["bn1_beta"] - p["bn1_mean"] * s1)
    out_all = jnp.maximum(out_all, 0.0)
    return jax.nn.sigmoid(out_all @ p["wall"].T + p["ball"])


if __name__ == "__main__":
    key = jax.random.PRNGKey(0)
    k_x, k_p = jax.random.split(key)

    B = 8
    # input consistent with the module: (B, N_FEATURES=21, 15 pep + 34 mhc = 49)
    x = jax.random.normal(k_x, (B, N_FEATURES, PEP_LEN + MHC_SEQ_LEN), jnp.float32)
    params = init_params(k_p)

    fwd = jax.jit(cnn_forward)
    out = jax.block_until_ready(fwd(x, params))
    ref = jax.block_until_ready(reference_forward(x, params))

    assert out.shape == (B, 1) and out.dtype == jnp.float32
    # bf16 MXU feed vs f32 reference -> slightly relaxed tolerance
    assert jnp.allclose(out, ref, atol=2e-2, rtol=2e-2), (out, ref)
    print("KERNEL_OK")
</pallas_src>

<mosaic_0001>
module attributes {stable_mosaic.version = 11 : i64} {
  func.func @cnn_kernel(%arg0: i32, %arg1: memref<16x315xbf16, #tpu.memory_space<vmem>>, %arg2: memref<16x714xbf16, #tpu.memory_space<vmem>>, %arg3: memref<189x20xbf16, #tpu.memory_space<vmem>>, %arg4: memref<20x60xbf16, #tpu.memory_space<vmem>>, %arg5: memref<714x60xbf16, #tpu.memory_space<vmem>>, %arg6: memref<8x128xf32, #tpu.memory_space<vmem>>, %arg7: memref<16x1xf32, #tpu.memory_space<vmem>>, %arg8: memref<112x189xbf16, #tpu.memory_space<vmem>>) attributes {dimension_semantics = [#tpu.dimension_semantics<parallel>], iteration_bounds = array<i64: 1>, scalar_prefetch = 0 : i64, scratch_operands = 1 : i64, tpu.core_type = #tpu.core_type<tc>, window_params = [{transform_indices = @transform_0, window_bounds = array<i64: 16, 315>}, {transform_indices = @transform_1, window_bounds = array<i64: 16, 714>}, {pipeline_mode = #tpu.pipeline_mode<synchronous>, transform_indices = @transform_2, window_bounds = array<i64: 189, 20>}, {pipeline_mode = #tpu.pipeline_mode<synchronous>, transform_indices = @transform_3, window_bounds = array<i64: 20, 60>}, {pipeline_mode = #tpu.pipeline_mode<synchronous>, transform_indices = @transform_4, window_bounds = array<i64: 714, 60>}, {pipeline_mode = #tpu.pipeline_mode<synchronous>, transform_indices = @transform_5, window_bounds = array<i64: 8, 128>}, {transform_indices = @transform_6, window_bounds = array<i64: 16, 1>}]} {
    %c0 = arith.constant 0 : index
    %c0_0 = arith.constant 0 : index
    %0 = vector.load %arg1[%c0, %c0_0] : memref<16x315xbf16, #tpu.memory_space<vmem>>, vector<16x189xbf16>
    %c0_1 = arith.constant 0 : index
    %c0_2 = arith.constant 0 : index
    %1 = vector.load %arg8[%c0_1, %c0_2] : memref<112x189xbf16, #tpu.memory_space<vmem>>, vector<16x189xbf16>
    tpu.vector_store %arg8[%c0_1, %c0_2], %0 {strides = array<i32>} : memref<112x189xbf16, #tpu.memory_space<vmem>>, vector<16x189xbf16>,
    %c0_3 = arith.constant 0 : index
    %c21 = arith.constant 21 : index
    %2 = vector.load %arg1[%c0_3, %c21] : memref<16x315xbf16, #tpu.memory_space<vmem>>, vector<16x189xbf16>
    %c16 = arith.constant 16 : index
    %c0_4 = arith.constant 0 : index
    %3 = vector.load %arg8[%c16, %c0_4] : memref<112x189xbf16, #tpu.memory_space<vmem>>, vector<16x189xbf16>
    tpu.vector_store %arg8[%c16, %c0_4], %2 {strides = array<i32>} : memref<112x189xbf16, #tpu.memory_space<vmem>>, vector<16x189xbf16>,
    %c0_5 = arith.constant 0 : index
    %c42 = arith.constant 42 : index
    %4 = vector.load %arg1[%c0_5, %c42] : memref<16x315xbf16, #tpu.memory_space<vmem>>, vector<16x189xbf16>
    %c32 = arith.constant 32 : index
    %c0_6 = arith.constant 0 : index
    %5 = vector.load %arg8[%c32, %c0_6] : memref<112x189xbf16, #tpu.memory_space<vmem>>, vector<16x189xbf16>
    tpu.vector_store %arg8[%c32, %c0_6], %4 {strides = array<i32>} : memref<112x189xbf16, #tpu.memory_space<vmem>>, vector<16x189xbf16>,
    %c0_7 = arith.constant 0 : index
    %c63 = arith.constant 63 : index
    %6 = vector.load %arg1[%c0_7, %c63] : memref<16x315xbf16, #tpu.memory_space<vmem>>, vector<16x189xbf16>
    %c48 = arith.constant 48 : index
    %c0_8 = arith.constant 0 : index
    %7 = vector.load %arg8[%c48, %c0_8] : memref<112x189xbf16, #tpu.memory_space<vmem>>, vector<16x189xbf16>
    tpu.vector_store %arg8[%c48, %c0_8], %6 {strides = array<i32>} : memref<112x189xbf16, #tpu.memory_space<vmem>>, vector<16x189xbf16>,
    %c0_9 = arith.constant 0 : index
    %c84 = arith.constant 84 : index
    %8 = vector.load %arg1[%c0_9, %c84] : memref<16x315xbf16, #tpu.memory_space<vmem>>, vector<16x189xbf16>
    %c64 = arith.constant 64 : index
    %c0_10 = arith.constant 0 : index
    %9 = vector.load %arg8[%c64, %c0_10] : memref<112x189xbf16, #tpu.memory_space<vmem>>, vector<16x189xbf16>
    tpu.vector_store %arg8[%c64, %c0_10], %8 {strides = array<i32>} : memref<112x189xbf16, #tpu.memory_space<vmem>>, vector<16x189xbf16>,
    %c0_11 = arith.constant 0 : index
    %c105 = arith.constant 105 : index
    %10 = vector.load %arg1[%c0_11, %c105] : memref<16x315xbf16, #tpu.memory_space<vmem>>, vector<16x189xbf16>
    %c80 = arith.constant 80 : index
    %c0_12 = arith.constant 0 : index
    %11 = vector.load %arg8[%c80, %c0_12] : memref<112x189xbf16, #tpu.memory_space<vmem>>, vector<16x189xbf16>
    tpu.vector_store %arg8[%c80, %c0_12], %10 {strides = array<i32>} : memref<112x189xbf16, #tpu.memory_space<vmem>>, vector<16x189xbf16>,
    %c0_13 = arith.constant 0 : index
    %c126 = arith.constant 126 : index
    %12 = vector.load %arg1[%c0_13, %c126] : memref<16x315xbf16, #tpu.memory_space<vmem>>, vector<16x189xbf16>
    %c96 = arith.constant 96 : index
    %c0_14 = arith.constant 0 : index
    %13 = vector.load %arg8[%c96, %c0_14] : memref<112x189xbf16, #tpu.memory_space<vmem>>, vector<16x189xbf16>
    tpu.vector_store %arg8[%c96, %c0_14], %12 {strides = array<i32>} : memref<112x189xbf16, #tpu.memory_space<vmem>>, vector<16x189xbf16>,
    %c0_15 = arith.constant 0 : index
    %c0_16 = arith.constant 0 : index
    %14 = vector.load %arg8[%c0_15, %c0_16] : memref<112x189xbf16, #tpu.memory_space<vmem>>, vector<112x189xbf16>
    %c0_17 = arith.constant 0 : index
    %c0_18 = arith.constant 0 : index
    %15 = vector.load %arg3[%c0_17, %c0_18] : memref<189x20xbf16, #tpu.memory_space<vmem>>, vector<189x20xbf16>
    %cst = arith.constant dense<0.000000e+00> : vector<112x20xf32>
    %16 = tpu.matmul %14, %15, %cst {dimension_numbers = #tpu.dot_dimension_numbers<[1], [0], [0], [1], [0, 0, 1, 1], [], []>} : vector<112x189xbf16>, vector<189x20xbf16>, vector<112x20xf32> -> vector<112x20xf32>
    %17 = vector.extract_strided_slice %16 {offsets = [0, 0], sizes = [16, 20], strides = [1, 1]} : vector<112x20xf32> to vector<16x20xf32>
    %18 = vector.extract_strided_slice %16 {offsets = [16, 0], sizes = [16, 20], strides = [1, 1]} : vector<112x20xf32> to vector<16x20xf32>
    %19 = arith.maximumf %17, %18 : vector<16x20xf32>
    %20 = vector.extract_strided_slice %16 {offsets = [32, 0], sizes = [16, 20], strides = [1, 1]} : vector<112x20xf32> to vector<16x20xf32>
    %21 = arith.maximumf %19, %20 : vector<16x20xf32>
    %22 = vector.extract_strided_slice %16 {offsets = [48, 0], sizes = [16, 20], strides = [1, 1]} : vector<112x20xf32> to vector<16x20xf32>
    %23 = arith.maximumf %21, %22 : vector<16x20xf32>
    %24 = vector.extract_strided_slice %16 {offsets = [64, 0], sizes = [16, 20], strides = [1, 1]} : vector<112x20xf32> to vector<16x20xf32>
    %25 = arith.maximumf %23, %24 : vector<16x20xf32>
    %26 = vector.extract_strided_slice %16 {offsets = [80, 0], sizes = [16, 20], strides = [1, 1]} : vector<112x20xf32> to vector<16x20xf32>
    %27 = arith.maximumf %25, %26 : vector<16x20xf32>
    %28 = vector.extract_strided_slice %16 {offsets = [96, 0], sizes = [16, 20], strides = [1, 1]} : vector<112x20xf32> to vector<16x20xf32>
    %29 = arith.maximumf %27, %28 : vector<16x20xf32>
    %c0_19 = arith.constant 0 : index
    %c0_20 = arith.constant 0 : index
    %30 = vector.load %arg6[%c0_19, %c0_20] : memref<8x128xf32, #tpu.memory_space<vmem>>, vector<1x20xf32>
    %31 = vector.broadcast %30 : vector<1x20xf32> to vector<16x20xf32>
    %32 = arith.addf %29, %31 : vector<16x20xf32>
    %cst_21 = arith.constant 0.000000e+00 : f32
    %33 = vector.broadcast %cst_21 : f32 to vector<16x20xf32>
    %34 = arith.maximumf %32, %33 : vector<16x20xf32>
    %35 = arith.truncf %34 : vector<16x20xf32> to vector<16x20xbf16>
    %c0_22 = arith.constant 0 : index
    %c0_23 = arith.constant 0 : index
    %36 = vector.load %arg4[%c0_22, %c0_23] : memref<20x60xbf16, #tpu.memory_space<vmem>>, vector<20x60xbf16>
    %cst_24 = arith.constant dense<0.000000e+00> : vector<16x60xf32>
    %37 = tpu.matmul %35, %36, %cst_24 {dimension_numbers = #tpu.dot_dimension_numbers<[1], [0], [0], [1], [0, 0, 1, 1], [], []>} : vector<16x20xbf16>, vector<20x60xbf16>, vector<16x60xf32> -> vector<16x60xf32>
    %c1 = arith.constant 1 : index
    %c0_25 = arith.constant 0 : index
    %38 = vector.load %arg6[%c1, %c0_25] : memref<8x128xf32, #tpu.memory_space<vmem>>, vector<1x60xf32>
    %39 = vector.broadcast %38 : vector<1x60xf32> to vector<16x60xf32>
    %40 = arith.addf %37, %39 : vector<16x60xf32>
    %c0_26 = arith.constant 0 : index
    %c0_27 = arith.constant 0 : index
    %41 = vector.load %arg2[%c0_26, %c0_27] : memref<16x714xbf16, #tpu.memory_space<vmem>>, vector<16x714xbf16>
    %c0_28 = arith.constant 0 : index
    %c0_29 = arith.constant 0 : index
    %42 = vector.load %arg5[%c0_28, %c0_29] : memref<714x60xbf16, #tpu.memory_space<vmem>>, vector<714x60xbf16>
    %cst_30 = arith.constant dense<0.000000e+00> : vector<16x60xf32>
    %43 = tpu.matmul %41, %42, %cst_30 {dimension_numbers = #tpu.dot_dimension_numbers<[1], [0], [0], [1], [0, 0, 1, 1], [], []>} : vector<16x714xbf16>, vector<714x60xbf16>, vector<16x60xf32> -> vector<16x60xf32>
    %c2 = arith.constant 2 : index
    %c0_31 = arith.constant 0 : index
    %44 = vector.load %arg6[%c2, %c0_31] : memref<8x128xf32, #tpu.memory_space<vmem>>, vector<1x60xf32>
    %45 = vector.broadcast %44 : vector<1x60xf32> to vector<16x60xf32>
    %46 = arith.addf %43, %45 : vector<16x60xf32>
    %cst_32 = arith.constant 0.000000e+00 : f32
    %47 = vector.broadcast %cst_32 : f32 to vector<16x60xf32>
    %48 = arith.maximumf %40, %47 : vector<16x60xf32>
    %cst_33 = arith.constant 0.000000e+00 : f32
    %49 = vector.broadcast %cst_33 : f32 to vector<16x60xf32>
    %50 = arith.maximumf %46, %49 : vector<16x60xf32>
    %c3 = arith.constant 3 : index
    %c0_34 = arith.constant 0 : index
    %51 = vector.load %arg6[%c3, %c0_34] : memref<8x128xf32, #tpu.memory_space<vmem>>, vector<1x60xf32>
    %c4 = arith.constant 4 : index
    %c0_35 = arith.constant 0 : index
    %52 = vector.load %arg6[%c4, %c0_35] : memref<8x128xf32, #tpu.memory_space<vmem>>, vector<1x60xf32>
    %c5 = arith.constant 5 : index
    %c0_36 = arith.constant 0 : index
    %53 = vector.load %arg6[%c5, %c0_36] : memref<8x128xf32, #tpu.memory_space<vmem>>, vector<1x1xf32>
    %54 = vector.broadcast %51 : vector<1x60xf32> to vector<16x60xf32>
    %55 = arith.mulf %48, %54 : vector<16x60xf32>
    %56 = vector.broadcast %52 : vector<1x60xf32> to vector<16x60xf32>
    %57 = arith.mulf %50, %56 : vector<16x60xf32>
    %58 = arith.addf %55, %57 : vector<16x60xf32>
    %cst_37 = arith.constant dense<0.000000e+00> : vector<16xf32>
    %59 = vector.multi_reduction <add>, %58, %cst_37 [1] : vector<16x60xf32> to vector<16xf32>
    %60 = vector.shape_cast %59 : vector<16xf32> to vector<16x1xf32>
    %61 = vector.broadcast %53 : vector<1x1xf32> to vector<16x1xf32>
    %62 = arith.addf %60, %61 : vector<16x1xf32>
    %63 = arith.negf %62 : vector<16x1xf32>
    %64 = math.exp %63 : vector<16x1xf32>
    %cst_38 = arith.constant 1.000000e+00 : f32
    %65 = vector.broadcast %cst_38 : f32 to vector<16x1xf32>
    %66 = arith.addf %65, %64 : vector<16x1xf32>
    %67 = arith.divf %65, %66 : vector<16x1xf32>
    %c0_39 = arith.constant 0 : index
    %c0_40 = arith.constant 0 : index
    %68 = vector.load %arg7[%c0_39, %c0_40] : memref<16x1xf32, #tpu.memory_space<vmem>>, vector<16x1xf32>
    tpu.vector_store %arg7[%c0_39, %c0_40], %67 {strides = array<i32>} : memref<16x1xf32, #tpu.memory_space<vmem>>, vector<16x1xf32>,
    return
  }
  func.func @transform_0(%arg0: i32) -> (i32, i32) {
    %c0_i32 = arith.constant 0 : i32
    %c0_i32_0 = arith.constant 0 : i32
    return %arg0, %c0_i32 : i32, i32
  }
  func.func @transform_1(%arg0: i32) -> (i32, i32) {
    %c0_i32 = arith.constant 0 : i32
    %c0_i32_0 = arith.constant 0 : i32
    return %arg0, %c0_i32 : i32, i32
  }
  func.func @transform_2(%arg0: i32) -> (i32, i32) {
    %c0_i32 = arith.constant 0 : i32
    %c0_i32_0 = arith.constant 0 : i32
    %c0_i32_1 = arith.constant 0 : i32
    return %c0_i32, %c0_i32_0 : i32, i32
  }
  func.func @transform_3(%arg0: i32) -> (i32, i32) {
    %c0_i32 = arith.constant 0 : i32
    %c0_i32_0 = arith.constant 0 : i32
    %c0_i32_1 = arith.constant 0 : i32
    return %c0_i32, %c0_i32_0 : i32, i32
  }
  func.func @transform_4(%arg0: i32) -> (i32, i32) {
    %c0_i32 = arith.constant 0 : i32
    %c0_i32_0 = arith.constant 0 : i32
    %c0_i32_1 = arith.constant 0 : i32
    return %c0_i32, %c0_i32_0 : i32, i32
  }
  func.func @transform_5(%arg0: i32) -> (i32, i32) {
    %c0_i32 = arith.constant 0 : i32
    %c0_i32_0 = arith.constant 0 : i32
    %c0_i32_1 = arith.constant 0 : i32
    return %c0_i32, %c0_i32_0 : i32, i32
  }
  func.func @transform_6(%arg0: i32) -> (i32, i32) {
    %c0_i32 = arith.constant 0 : i32
    %c0_i32_0 = arith.constant 0 : i32
    return %arg0, %c0_i32 : i32, i32
  }
}

</mosaic_0001>

<llo_original>
// kernel: cnn_forward.1
$region0: #{cnn_forward.1}
  #allocation0 [shape = 'u32[]', space=smem, size = 0x4, offset = 0x4, fixed_abs, tag = 'smem constant byte address 0x4 - core index']
  #allocation1 [shape = 'u32[72,128]{1,0:T(1,128)}', space=vmem, size = 0x9000, scoped, tag = 'internal scratch']
  #allocation2 [shape = 'bf16[112,189]{1,0:T(8,128)(2,1)}', space=vmem, size = 0xe000, scoped, tag = 'scratch operand']
  %s0 = inlined_call_operand.vmem [shape: bf16[16,315], index: 0, kind: input, shape index: {}]
  %s1 = inlined_call_operand.vmem [shape: bf16[16,714], index: 1, kind: input, shape index: {}]
  %s2 = inlined_call_operand.vmem [shape: bf16[189,20], index: 2, kind: input, shape index: {}]
  %s3 = inlined_call_operand.vmem [shape: bf16[20,60], index: 3, kind: input, shape index: {}]
  %s4 = inlined_call_operand.vmem [shape: bf16[714,60], index: 4, kind: input, shape index: {}]
  %s5 = inlined_call_operand.vmem [shape: f32[8,128], index: 5, kind: input, shape index: {}]
  %s6 = inlined_call_operand.vmem [shape: f32[16,1], index: 6, kind: output, shape index: {}]
  %s7 = sld [smem:[#allocation0]]
  $region34: #{cnn_forward.1} parent=0
    _
  %s9 = ssub.s32 1, %s7
  %s10 = scalar_select 0, %s9, %s7
  // Predicated region
  $region2: #{cnn_forward.1} parent=0 // pred_check
    _
  $region3: #{cnn_forward.1} parent=0 // pred_check_branch
    %12 = sbr.rel (0) target = $region5
  $region4: #{cnn_forward.1} parent=0 // pred_region
    _
  $region5: #{cnn_forward.1} parent=0 // pred_fallthru
    _
  // Predicated region
  $region6: #{cnn_forward.1} parent=0 // pred_check
    _
  $region7: #{cnn_forward.1} parent=0 // pred_check_branch
    %14 = sbr.rel (0) target = $region9
  $region8: #{cnn_forward.1} parent=0 // pred_region
    _
  $region9: #{cnn_forward.1} parent=0 // pred_fallthru
    _
  // Predicated region
  $region10: #{cnn_forward.1} parent=0 // pred_check
    _
  $region11: #{cnn_forward.1} parent=0 // pred_check_branch
    %16 = sbr.rel (0) target = $region13
  $region12: #{cnn_forward.1} parent=0 // pred_region
    _
  $region13: #{cnn_forward.1} parent=0 // pred_fallthru
    _
  // Predicated region
  $region14: #{cnn_forward.1} parent=0 // pred_check
    _
  $region15: #{cnn_forward.1} parent=0 // pred_check_branch
    %18 = sbr.rel (0) target = $region17
  $region16: #{cnn_forward.1} parent=0 // pred_region
    _
  $region17: #{cnn_forward.1} parent=0 // pred_fallthru
    _
  // Predicated region
  $region18: #{cnn_forward.1} parent=0 // pred_check
    _
  $region19: #{cnn_forward.1} parent=0 // pred_check_branch
    %20 = sbr.rel (0) target = $region21
  $region20: #{cnn_forward.1} parent=0 // pred_region
    _
  $region21: #{cnn_forward.1} parent=0 // pred_fallthru
    _
  // Predicated region
  $region22: #{cnn_forward.1} parent=0 // pred_check
    _
  $region23: #{cnn_forward.1} parent=0 // pred_check_branch
    %22 = sbr.rel (0) target = $region25
  $region24: #{cnn_forward.1} parent=0 // pred_region
    _
  $region25: #{cnn_forward.1} parent=0 // pred_fallthru
    _
  %v24 = vld [vmem:[%s0] sm:$0xff]
  %v25 = vld [vmem:[%s0 + $0xc] sm:$0xff]
  %vm26 = vcmask 1043456
  %vm27 = vcmask 498692
  %vm28 = vmor %vm27, %vm26
  %29 = vst.msk [vmem:[#allocation2] sm:$0xff] %vm28, %v24
  %30 = vst.msk [vmem:[#allocation2 + $0x8] sm:$0xff] %vm28, %v25
  %v31 = vld [vmem:[%s0] sm:$0xff]
  %v32 = vld [vmem:[%s0 + $0xc] sm:$0xff]
  %35 = vrot.lane.b32.xlu0 %v31, 107
  %v36 = vpop.permute.xlu0 %35
  %37 = vrot.lane.b32.xlu0 %v32, 107
  %v38 = vpop.permute.xlu0 %37
  %v39 = vrot.slane %v36, 4
  %v40 = vrot.slane %v38, 4
  %vm41 = vcmask 875520
  %v42 = vsel %vm41, %v36, %v39
  %v43 = vsel %vm41, %v38, %v40
  %46 = vst.msk [vmem:[#allocation2 + $0x10] sm:$0xff] %vm28, %v42
  %47 = vst.msk [vmem:[#allocation2 + $0x18] sm:$0xff] %vm28, %v43
  %v48 = vld [vmem:[%s0] sm:$0xff]
  %v49 = vld [vmem:[%s0 + $0xc] sm:$0xff]
  %52 = vrot.lane.b32.xlu0 %v48, 86
  %v53 = vpop.permute.xlu0 %52
  %54 = vrot.lane.b32.xlu0 %v49, 86
  %v55 = vpop.permute.xlu0 %54
  %v56 = vrot.slane %v53, 4
  %v57 = vrot.slane %v55, 4
  %vm58 = vcmask 703488
  %v59 = vsel %vm58, %v53, %v56
  %v60 = vsel %vm58, %v55, %v57
  %63 = vst.msk [vmem:[#allocation2 + $0x20] sm:$0xff] %vm28, %v59
  %64 = vst.msk [vmem:[#allocation2 + $0x28] sm:$0xff] %vm28, %v60
  %v65 = vld [vmem:[%s0] sm:$0xff]
  %v66 = vld [vmem:[%s0 + $0xc] sm:$0xff]
  %69 = vrot.lane.b32.xlu0 %v65, 65
  %v70 = vpop.permute.xlu0 %69
  %71 = vrot.lane.b32.xlu0 %v66, 65
  %v72 = vpop.permute.xlu0 %71
  %v73 = vrot.slane %v70, 4
  %v74 = vrot.slane %v72, 4
  %vm75 = vcmask 531456
  %v76 = vsel %vm75, %v70, %v73
  %v77 = vsel %vm75, %v72, %v74
  %80 = vst.msk [vmem:[#allocation2 + $0x30] sm:$0xff] %vm28, %v76
  %81 = vst.msk [vmem:[#allocation2 + $0x38] sm:$0xff] %vm28, %v77
  %v82 = vld [vmem:[%s0] sm:$0xff]
  %v83 = vld [vmem:[%s0 + $0x8] sm:$0xf]
  %v84 = vld [vmem:[%s0 + $0xc] sm:$0xff]
  %v85 = vld [vmem:[%s0 + $0x14] sm:$0xf]
  %90 = vrot.lane.b32.xlu0 %v82, 44
  %v91 = vpop.permute.xlu0 %90
  %92 = vrot.lane.b32.xlu0 %v83, 44
  %v93 = vpop.permute.xlu0 %92
  %94 = vrot.lane.b32.xlu0 %v84, 44
  %v95 = vpop.permute.xlu0 %94
  %96 = vrot.lane.b32.xlu0 %v85, 44
  %v97 = vpop.permute.xlu0 %96
  %v98 = vrot.slane %v91, 4
  %v99 = vrot.slane %v93, 4
  %v100 = vrot.slane %v95, 4
  %v101 = vrot.slane %v97, 4
  %vm102 = vcmask 1043456
  %v103 = vsel %vm102, %v98, %v99
  %vm104 = vcmask 359424
  %v105 = vsel %vm104, %v91, %v103
  %v106 = vsel %vm102, %v100, %v101
  %v107 = vsel %vm104, %v95, %v106
  %110 = vst.msk [vmem:[#allocation2 + $0x40] sm:$0xff] %vm28, %v105
  %111 = vst.msk [vmem:[#allocation2 + $0x48] sm:$0xff] %vm28, %v107
  %v112 = vld [vmem:[%s0] sm:$0xff]
  %v113 = vld [vmem:[%s0 + $0x8] sm:$0xf]
  %v114 = vld [vmem:[%s0 + $0xc] sm:$0xff]
  %v115 = vld [vmem:[%s0 + $0x14] sm:$0xf]
  %120 = vrot.lane.b32.xlu0 %v112, 23
  %v121 = vpop.permute.xlu0 %120
  %122 = vrot.lane.b32.xlu0 %v113, 23
  %v123 = vpop.permute.xlu0 %122
  %124 = vrot.lane.b32.xlu0 %v114, 23
  %v125 = vpop.permute.xlu0 %124
  %126 = vrot.lane.b32.xlu0 %v115, 23
  %v127 = vpop.permute.xlu0 %126
  %v128 = vrot.slane %v121, 4
  %v129 = vrot.slane %v123, 4
  %v130 = vrot.slane %v125, 4
  %v131 = vrot.slane %v127, 4
  %v132 = vsel %vm102, %v128, %v129
  %vm133 = vcmask 187392
  %v134 = vsel %vm133, %v121, %v132
  %v135 = vsel %vm102, %v130, %v131
  %v136 = vsel %vm133, %v125, %v135
  %139 = vst.msk [vmem:[#allocation2 + $0x50] sm:$0xff] %vm28, %v134
  %140 = vst.msk [vmem:[#allocation2 + $0x58] sm:$0xff] %vm28, %v136
  %v141 = vld [vmem:[%s0] sm:$0xff]
  %v142 = vld [vmem:[%s0 + $0x8] sm:$0xf]
  %v143 = vld [vmem:[%s0 + $0xc] sm:$0xff]
  %v144 = vld [vmem:[%s0 + $0x14] sm:$0xf]
  %149 = vrot.lane.b32.xlu0 %v141, 2
  %v150 = vpop.permute.xlu0 %149
  %151 = vrot.lane.b32.xlu0 %v142, 2
  %v152 = vpop.permute.xlu0 %151
  %153 = vrot.lane.b32.xlu0 %v143, 2
  %v154 = vpop.permute.xlu0 %153
  %155 = vrot.lane.b32.xlu0 %v144, 2
  %v156 = vpop.permute.xlu0 %155
  %v157 = vrot.slane %v150, 4
  %v158 = vrot.slane %v152, 4
  %v159 = vrot.slane %v154, 4
  %v160 = vrot.slane %v156, 4
  %v161 = vsel %vm102, %v157, %v158
  %vm162 = vcmask 15360
  %v163 = vsel %vm162, %v150, %v161
  %v164 = vsel %vm102, %v159, %v160
  %v165 = vsel %vm162, %v154, %v164
  %168 = vst.msk [vmem:[#allocation2 + $0x60] sm:$0xff] %vm28, %v163
  %169 = vst.msk [vmem:[#allocation2 + $0x68] sm:$0xff] %vm28, %v165
  %v170 = vld [vmem:[#allocation2] sm:$0xff]
  %v171 = vld [vmem:[#allocation2 + $0x8] sm:$0xff]
  %v172 = vld [vmem:[#allocation2 + $0x10] sm:$0xff]
  %v173 = vld [vmem:[#allocation2 + $0x18] sm:$0xff]
  %v174 = vld [vmem:[#allocation2 + $0x20] sm:$0xff]
  %v175 = vld [vmem:[#allocation2 + $0x28] sm:$0xff]
  %v176 = vld [vmem:[#allocation2 + $0x30] sm:$0xff]
  %v177 = vld [vmem:[#allocation2 + $0x38] sm:$0xff]
  %v178 = vld [vmem:[#allocation2 + $0x40] sm:$0xff]
  %v179 = vld [vmem:[#allocation2 + $0x48] sm:$0xff]
  %v180 = vld [vmem:[#allocation2 + $0x50] sm:$0xff]
  %v181 = vld [vmem:[#allocation2 + $0x58] sm:$0xff]
  %v182 = vld [vmem:[#allocation2 + $0x60] sm:$0xff]
  %v183 = vld [vmem:[#allocation2 + $0x68] sm:$0xff]
  %v184 = vld [vmem:[%s2] sm:$0xf]
  %v185 = vld [vmem:[%s2 + $0x4] sm:$0xf]
  %v186 = vld [vmem:[%s2 + $0x8] sm:$0xf]
  %v187 = vld [vmem:[%s2 + $0xc] sm:$0xf]
  %v188 = vld [vmem:[%s2 + $0x10] sm:$0xf]
  %v189 = vld [vmem:[%s2 + $0x14] sm:$0xf]
  %v190 = vld [vmem:[%s2 + $0x18] sm:$0xf]
  %v191 = vld [vmem:[%s2 + $0x1c] sm:$0xf]
  %v192 = vld [vmem:[%s2 + $0x20] sm:$0xf]
  %v193 = vld [vmem:[%s2 + $0x24] sm:$0xf]
  %v194 = vld [vmem:[%s2 + $0x28] sm:$0xf]
  %v195 = vld [vmem:[%s2 + $0x2c] sm:$0xf]
  %v196 = vld [vmem:[%s2 + $0x30] sm:$0xf]
  %v197 = vld [vmem:[%s2 + $0x34] sm:$0xf]
  %v198 = vld [vmem:[%s2 + $0x38] sm:$0xf]
  %v199 = vld [vmem:[%s2 + $0x3c] sm:$0xf]
  %v200 = vld [vmem:[%s2 + $0x40] sm:$0xf]
  %v201 = vld [vmem:[%s2 + $0x44] sm:$0xf]
  %v202 = vld [vmem:[%s2 + $0x48] sm:$0xf]
  %v203 = vld [vmem:[%s2 + $0x4c] sm:$0xf]
  %v204 = vld [vmem:[%s2 + $0x50] sm:$0xf]
  %v205 = vld [vmem:[%s2 + $0x54] sm:$0xf]
  %v206 = vld [vmem:[%s2 + $0x58] sm:$0xf]
  %v207 = vld [vmem:[%s2 + $0x5c] sm:$0x7]
  %v222 = vunpack.c.l.b16 %v170
  %v223 = vunpack.c.h.b16 %v170
  %v224 = vunpack.c.l.b16 %v171
  %v225 = vunpack.c.h.b16 %v171
  %v226 = vunpack.c.l.b16 %v172
  %v227 = vunpack.c.h.b16 %v172
  %v228 = vunpack.c.l.b16 %v173
  %v229 = vunpack.c.h.b16 %v173
  %v230 = vunpack.c.l.b16 %v174
  %v231 = vunpack.c.h.b16 %v174
  %v232 = vunpack.c.l.b16 %v175
  %v233 = vunpack.c.h.b16 %v175
  %v234 = vunpack.c.l.b16 %v176
  %v235 = vunpack.c.h.b16 %v176
  %v236 = vunpack.c.l.b16 %v177
  %v237 = vunpack.c.h.b16 %v177
  %v238 = vunpack.c.l.b16 %v178
  %v239 = vunpack.c.h.b16 %v178
  %v240 = vunpack.c.l.b16 %v179
  %v241 = vunpack.c.h.b16 %v179
  %v242 = vunpack.c.l.b16 %v180
  %v243 = vunpack.c.h.b16 %v180
  %v244 = vunpack.c.l.b16 %v181
  %v245 = vunpack.c.h.b16 %v181
  %v246 = vunpack.c.l.b16 %v182
  %v247 = vunpack.c.h.b16 %v182
  %v248 = vunpack.c.l.b16 %v183
  %v249 = vunpack.c.h.b16 %v183
  %v250 = vpack.c.b16 %v224, %v222
  %v251 = vpack.c.b16 %v225, %v223
  %v252 = vpack.c.b16 %v228, %v226
  %v253 = vpack.c.b16 %v229, %v227
  %v254 = vpack.c.b16 %v232, %v230
  %v255 = vpack.c.b16 %v233, %v231
  %v256 = vpack.c.b16 %v236, %v234
  %v257 = vpack.c.b16 %v237, %v235
  %v258 = vpack.c.b16 %v240, %v238
  %v259 = vpack.c.b16 %v241, %v239
  %v260 = vpack.c.b16 %v244, %v242
  %v261 = vpack.c.b16 %v245, %v243
  %v262 = vpack.c.b16 %v248, %v246
  %v263 = vpack.c.b16 %v249, %v247
  %v295 = vunpack.c.l.b16 %v184
  %v296 = vunpack.c.l.b16 %v185
  %v297 = vunpack.c.l.b16 %v186
  %v298 = vunpack.c.l.b16 %v187
  %v299 = vunpack.c.l.b16 %v188
  %v300 = vunpack.c.l.b16 %v189
  %v301 = vunpack.c.l.b16 %v190
  %v302 = vunpack.c.l.b16 %v191
  %v303 = vunpack.c.l.b16 %v192
  %v304 = vunpack.c.l.b16 %v193
  %v305 = vunpack.c.l.b16 %v194
  %v306 = vunpack.c.l.b16 %v195
  %v307 = vunpack.c.l.b16 %v196
  %v308 = vunpack.c.l.b16 %v197
  %v309 = vunpack.c.l.b16 %v198
  %v310 = vunpack.c.l.b16 %v199
  %v311 = vunpack.c.l.b16 %v200
  %v312 = vunpack.c.l.b16 %v201
  %v313 = vunpack.c.l.b16 %v202
  %v314 = vunpack.c.l.b16 %v203
  %v315 = vunpack.c.l.b16 %v204
  %v316 = vunpack.c.l.b16 %v205
  %v317 = vunpack.c.l.b16 %v206
  %v318 = vunpack.c.l.b16 %v207
  %v319 = vpack.c.b16 %v296, %v295
  %v320 = vpack.c.b16 %v298, %v297
  %v321 = vpack.c.b16 %v300, %v299
  %v322 = vpack.c.b16 %v302, %v301
  %v323 = vpack.c.b16 %v304, %v303
  %v324 = vpack.c.b16 %v306, %v305
  %v325 = vpack.c.b16 %v308, %v307
  %v326 = vpack.c.b16 %v310, %v309
  %v327 = vpack.c.b16 %v312, %v311
  %v328 = vpack.c.b16 %v314, %v313
  %v329 = vpack.c.b16 %v316, %v315
  %v330 = vpack.c.b16 %v318, %v317
  %vm342 = vcmask 498688
  %v344 = vsel %vm342, %v251, 0
  %v347 = vsel %vm342, %v253, 0
  %v350 = vsel %vm342, %v255, 0
  %v353 = vsel %vm342, %v257, 0
  %v356 = vsel %vm342, %v259, 0
  %v359 = vsel %vm342, %v261, 0
  %v362 = vsel %vm342, %v263, 0
  %vm364 = vcmask 1045504
  %vm365 = vcmask 1046528
  %v366 = vsel %vm364, 4294967295, 65535
  %v367 = vsel %vm365, %v366, 0
  %v369 = vand.u32 %v330, %v367
  %371 = vmatpush.bf16.msra.mxu0 %v326
  %372 = vmatpush.bf16.msra.mxu0 %v325
  %373 = vmatpush.bf16.msra.mxu0 %v324
  %374 = vmatpush.bf16.msra.mxu0 %v323
  %375 = vmatpush.bf16.msra.mxu0 %v322
  %376 = vmatpush.bf16.msra.mxu0 %v321
  %377 = vmatpush.bf16.msra.mxu0 %v320
  %378 = vmatpush.bf16.msra.mxu0 %v319
  %379 = vmatmul.bf16.gmra.mxu0 %v250
  %v380 = vpop.f32.mrf.mxu0
  %v381 = vadd.f32 0.0, %v380
  %v382 = vpop.f32.mrf.mxu0
  %v383 = vadd.f32 0.0, %v382
  %384 = vmatmul.bf16.gmra.mxu0 %v252
  %v385 = vpop.f32.mrf.mxu0
  %v386 = vadd.f32 0.0, %v385
  %v387 = vpop.f32.mrf.mxu0
  %v388 = vadd.f32 0.0, %v387
  %389 = vmatmul.bf16.gmra.mxu0 %v254
  %v390 = vpop.f32.mrf.mxu0
  %v391 = vadd.f32 0.0, %v390
  %v392 = vpop.f32.mrf.mxu0
  %v393 = vadd.f32 0.0, %v392
  %394 = vmatmul.bf16.gmra.mxu0 %v256
  %v395 = vpop.f32.mrf.mxu0
  %v396 = vadd.f32 0.0, %v395
  %v397 = vpop.f32.mrf.mxu0
  %v398 = vadd.f32 0.0, %v397
  %399 = vmatmul.bf16.gmra.mxu0 %v258
  %v400 = vpop.f32.mrf.mxu0
  %v401 = vadd.f32 0.0, %v400
  %v402 = vpop.f32.mrf.mxu0
  %v403 = vadd.f32 0.0, %v402
  %404 = vmatmul.bf16.gmra.mxu0 %v260
  %v405 = vpop.f32.mrf.mxu0
  %v406 = vadd.f32 0.0, %v405
  %v407 = vpop.f32.mrf.mxu0
  %v408 = vadd.f32 0.0, %v407
  %409 = vmatmul.bf16.gmra.mxu0 %v262
  %v410 = vpop.f32.mrf.mxu0
  %v411 = vadd.f32 0.0, %v410
  %v412 = vpop.f32.mrf.mxu0
  %v413 = vadd.f32 0.0, %v412
  %414 = vdwg.mxu0
  %415 = vmatpush.bf16.msra.mxu0 0
  %416 = vmatpush.bf16.msra.mxu0 0
  %417 = vmatpush.bf16.msra.mxu0 0
  %418 = vmatpush.bf16.msra.mxu0 0
  %419 = vmatpush.bf16.msra.mxu0 %v369
  %420 = vmatpush.bf16.msra.mxu0 %v329
  %421 = vmatpush.bf16.msra.mxu0 %v328
  %422 = vmatpush.bf16.msra.mxu0 %v327
  %423 = vmatmul.bf16.gmra.mxu0 %v344
  %v424 = vpop.f32.mrf.mxu0
  %v425 = vadd.f32 %v381, %v424
  %v426 = vpop.f32.mrf.mxu0
  %v427 = vadd.f32 %v383, %v426
  %428 = vmatmul.bf16.gmra.mxu0 %v347
  %v429 = vpop.f32.mrf.mxu0
  %v430 = vadd.f32 %v386, %v429
  %v431 = vpop.f32.mrf.mxu0
  %v432 = vadd.f32 %v388, %v431
  %433 = vmatmul.bf16.gmra.mxu0 %v350
  %v434 = vpop.f32.mrf.mxu0
  %v435 = vadd.f32 %v391, %v434
  %v436 = vpop.f32.mrf.mxu0
  %v437 = vadd.f32 %v393, %v436
  %438 = vmatmul.bf16.gmra.mxu0 %v353
  %v439 = vpop.f32.mrf.mxu0
  %v440 = vadd.f32 %v396, %v439
  %v441 = vpop.f32.mrf.mxu0
  %v442 = vadd.f32 %v398, %v441
  %443 = vmatmul.bf16.gmra.mxu0 %v356
  %v444 = vpop.f32.mrf.mxu0
  %v445 = vadd.f32 %v401, %v444
  %v446 = vpop.f32.mrf.mxu0
  %v447 = vadd.f32 %v403, %v446
  %448 = vmatmul.bf16.gmra.mxu0 %v359
  %v449 = vpop.f32.mrf.mxu0
  %v450 = vadd.f32 %v406, %v449
  %v451 = vpop.f32.mrf.mxu0
  %v452 = vadd.f32 %v408, %v451
  %453 = vmatmul.bf16.gmra.mxu0 %v362
  %v454 = vpop.f32.mrf.mxu0
  %v455 = vadd.f32 %v411, %v454
  %v456 = vpop.f32.mrf.mxu0
  %v457 = vadd.f32 %v413, %v456
  %458 = vdwg.mxu0
  %v459 = vmax.f32 %v425, %v430
  %v460 = vmax.f32 %v427, %v432
  %v461 = vmax.f32 %v459, %v435
  %v462 = vmax.f32 %v460, %v437
  %v463 = vmax.f32 %v461, %v440
  %v464 = vmax.f32 %v462, %v442
  %v465 = vmax.f32 %v463, %v445
  %v466 = vmax.f32 %v464, %v447
  %v467 = vmax.f32 %v465, %v450
  %v468 = vmax.f32 %v466, %v452
  %v469 = vmax.f32 %v467, %v455
  %v470 = vmax.f32 %v468, %v457
  %v471 = vld [vmem:[%s5] sm:$0x1]
  %v472 = vperm.slane %v471, 0
  %v473 = vadd.f32 %v469, %v472
  %v474 = vadd.f32 %v470, %v472
  %v475 = vmax.f32 %v473, 0.0
  %v476 = vmax.f32 %v474, 0.0
  %v477 = vpack.c.bf16 %v476, %v475
  %v478 = vld [vmem:[%s3] sm:$0xf]
  %v479 = vld [vmem:[%s3 + $0x4] sm:$0xf]
  %v480 = vld [vmem:[%s3 + $0x8] sm:$0x3]
  %v481 = vld [vmem:[%s5 + $0x1] sm:$0x1]
  %v482 = vperm.slane %v481, 0
  %v486 = vunpack.c.l.b16 %v478
  %v487 = vunpack.c.l.b16 %v479
  %v488 = vunpack.c.l.b16 %v480
  %v489 = vpack.c.b16 %v487, %v486
  %v490 = vpack.c.b16 %v488, %v488
  %vm492 = vcmask 162816
  %v494 = vsel %vm492, %v477, 0
  %vm496 = vcmask 1041408
  %v498 = vsel %vm496, %v490, 0
  %500 = vmatpush.bf16.msra.mxu0 0
  %501 = vmatpush.bf16.msra.mxu0 0
  %502 = vmatpush.bf16.msra.mxu0 0
  %503 = vmatpush.bf16.msra.mxu0 0
  %504 = vmatpush.bf16.msra.mxu0 0
  %505 = vmatpush.bf16.msra.mxu0 0
  %506 = vmatpush.bf16.msra.mxu0 %v498
  %507 = vmatpush.bf16.msra.mxu0 %v489
  %508 = vmatmul.bf16.gmra.mxu0 %v494
  %v509 = vpop.f32.mrf.mxu0
  %v510 = vadd.f32 %v482, %v509
  %v511 = vpop.f32.mrf.mxu0
  %v512 = vadd.f32 %v482, %v511
  %513 = vdwg.mxu0
  %v514 = vld [vmem:[%s1] sm:$0xff]
  %v515 = vld [vmem:[%s1 + $0x8] sm:$0xff]
  %v516 = vld [vmem:[%s1 + $0x10] sm:$0xff]
  %v517 = vld [vmem:[%s1 + $0x18] sm:$0xff]
  %v518 = vld [vmem:[%s1 + $0x20] sm:$0xff]
  %v519 = vld [vmem:[%s1 + $0x28] sm:$0xff]
  %v520 = vld [vmem:[%s4] sm:$0xf]
  %v521 = vld [vmem:[%s4 + $0x4] sm:$0xf]
  %v522 = vld [vmem:[%s4 + $0x8] sm:$0xf]
  %v523 = vld [vmem:[%s4 + $0xc] sm:$0xf]
  %v524 = vld [vmem:[%s4 + $0x10] sm:$0xf]
  %v525 = vld [vmem:[%s4 + $0x14] sm:$0xf]
  %v526 = vld [vmem:[%s4 + $0x18] sm:$0xf]
  %v527 = vld [vmem:[%s4 + $0x1c] sm:$0xf]
  %v528 = vld [vmem:[%s4 + $0x20] sm:$0xf]
  %v529 = vld [vmem:[%s4 + $0x24] sm:$0xf]
  %v530 = vld [vmem:[%s4 + $0x28] sm:$0xf]
  %v531 = vld [vmem:[%s4 + $0x2c] sm:$0xf]
  %v532 = vld [vmem:[%s4 + $0x30] sm:$0xf]
  %v533 = vld [vmem:[%s4 + $0x34] sm:$0xf]
  %v534 = vld [vmem:[%s4 + $0x38] sm:$0xf]
  %v535 = vld [vmem:[%s4 + $0x3c] sm:$0xf]
  %v536 = vld [vmem:[%s4 + $0x40] sm:$0xf]
  %v537 = vld [vmem:[%s4 + $0x44] sm:$0xf]
  %v538 = vld [vmem:[%s4 + $0x48] sm:$0xf]
  %v539 = vld [vmem:[%s4 + $0x4c] sm:$0xf]
  %v540 = vld [vmem:[%s4 + $0x50] sm:$0xf]
  %v541 = vld [vmem:[%s4 + $0x54] sm:$0xf]
  %v542 = vld [vmem:[%s4 + $0x58] sm:$0xf]
  %v543 = vld [vmem:[%s4 + $0x5c] sm:$0xf]
  %v544 = vld [vmem:[%s4 + $0x60] sm:$0xf]
  %v545 = vld [vmem:[%s4 + $0x64] sm:$0xf]
  %v546 = vld [vmem:[%s4 + $0x68] sm:$0xf]
  %v547 = vld [vmem:[%s4 + $0x6c] sm:$0xf]
  %v548 = vld [vmem:[%s4 + $0x70] sm:$0xf]
  %v549 = vld [vmem:[%s4 + $0x74] sm:$0xf]
  %v550 = vld [vmem:[%s4 + $0x78] sm:$0xf]
  %v551 = vld [vmem:[%s4 + $0x7c] sm:$0xf]
  %v552 = vld [vmem:[%s4 + $0x80] sm:$0xf]
  %v553 = vld [vmem:[%s4 + $0x84] sm:$0xf]
  %v554 = vld [vmem:[%s4 + $0x88] sm:$0xf]
  %v555 = vld [vmem:[%s4 + $0x8c] sm:$0xf]
  %v556 = vld [vmem:[%s4 + $0x90] sm:$0xf]
  %v557 = vld [vmem:[%s4 + $0x94] sm:$0xf]
  %v558 = vld [vmem:[%s4 + $0x98] sm:$0xf]
  %v559 = vld [vmem:[%s4 + $0x9c] sm:$0xf]
  %v560 = vld [vmem:[%s4 + $0xa0] sm:$0xf]
  %v561 = vld [vmem:[%s4 + $0xa4] sm:$0xf]
  %v562 = vld [vmem:[%s4 + $0xa8] sm:$0xf]
  %v563 = vld [vmem:[%s4 + $0xac] sm:$0xf]
  %v564 = vld [vmem:[%s4 + $0xb0] sm:$0xf]
  %v565 = vld [vmem:[%s4 + $0xb4] sm:$0xf]
  %v566 = vld [vmem:[%s4 + $0xb8] sm:$0xf]
  %v567 = vld [vmem:[%s4 + $0xbc] sm:$0xf]
  %v568 = vld [vmem:[%s4 + $0xc0] sm:$0xf]
  %v569 = vld [vmem:[%s4 + $0xc4] sm:$0xf]
  %v570 = vld [vmem:[%s4 + $0xc8] sm:$0xf]
  %v571 = vld [vmem:[%s4 + $0xcc] sm:$0xf]
  %v572 = vld [vmem:[%s4 + $0xd0] sm:$0xf]
  %v573 = vld [vmem:[%s4 + $0xd4] sm:$0xf]
  %v574 = vld [vmem:[%s4 + $0xd8] sm:$0xf]
  %v575 = vld [vmem:[%s4 + $0xdc] sm:$0xf]
  %v576 = vld [vmem:[%s4 + $0xe0] sm:$0xf]
  %v577 = vld [vmem:[%s4 + $0xe4] sm:$0xf]
  %v578 = vld [vmem:[%s4 + $0xe8] sm:$0xf]
  %v579 = vld [vmem:[%s4 + $0xec] sm:$0xf]
  %v580 = vld [vmem:[%s4 + $0xf0] sm:$0xf]
  %v581 = vld [vmem:[%s4 + $0xf4] sm:$0xf]
  %v582 = vld [vmem:[%s4 + $0xf8] sm:$0xf]
  %v583 = vld [vmem:[%s4 + $0xfc] sm:$0xf]
  %v584 = vld [vmem:[%s4 + $0x100] sm:$0xf]
  %v585 = vld [vmem:[%s4 + $0x104] sm:$0xf]
  %v586 = vld [vmem:[%s4 + $0x108] sm:$0xf]
  %v587 = vld [vmem:[%s4 + $0x10c] sm:$0xf]
  %v588 = vld [vmem:[%s4 + $0x110] sm:$0xf]
  %v589 = vld [vmem:[%s4 + $0x114] sm:$0xf]
  %v590 = vld [vmem:[%s4 + $0x118] sm:$0xf]
  %v591 = vld [vmem:[%s4 + $0x11c] sm:$0xf]
  %v592 = vld [vmem:[%s4 + $0x120] sm:$0xf]
  %v593 = vld [vmem:[%s4 + $0x124] sm:$0xf]
  %v594 = vld [vmem:[%s4 + $0x128] sm:$0xf]
  %v595 = vld [vmem:[%s4 + $0x12c] sm:$0xf]
  %v596 = vld [vmem:[%s4 + $0x130] sm:$0xf]
  %v597 = vld [vmem:[%s4 + $0x134] sm:$0xf]
  %v598 = vld [vmem:[%s4 + $0x138] sm:$0xf]
  %v599 = vld [vmem:[%s4 + $0x13c] sm:$0xf]
  %v600 = vld [vmem:[%s4 + $0x140] sm:$0xf]
  %v601 = vld [vmem:[%s4 + $0x144] sm:$0xf]
  %v602 = vld [vmem:[%s4 + $0x148] sm:$0xf]
  %v603 = vld [vmem:[%s4 + $0x14c] sm:$0xf]
  %v604 = vld [vmem:[%s4 + $0x150] sm:$0xf]
  %v605 = vld [vmem:[%s4 + $0x154] sm:$0xf]
  %v606 = vld [vmem:[%s4 + $0x158] sm:$0xf]
  %v607 = vld [vmem:[%s4 + $0x15c] sm:$0xf]
  %v608 = vld [vmem:[%s4 + $0x160] sm:$0xf]
  %v609 = vld [vmem:[%s4 + $0x164] sm:$0x1]
  %v610 = vld [vmem:[%s5 + $0x2] sm:$0x1]
  %v611 = vperm.slane %v610, 0
  %v618 = vunpack.c.l.b16 %v514
  %v619 = vunpack.c.h.b16 %v514
  %v620 = vunpack.c.l.b16 %v515
  %v621 = vunpack.c.h.b16 %v515
  %v622 = vunpack.c.l.b16 %v516
  %v623 = vunpack.c.h.b16 %v516
  %v624 = vunpack.c.l.b16 %v517
  %v625 = vunpack.c.h.b16 %v517
  %v626 = vunpack.c.l.b16 %v518
  %v627 = vunpack.c.h.b16 %v518
  %v628 = vunpack.c.l.b16 %v519
  %v629 = vunpack.c.h.b16 %v519
  %v630 = vpack.c.b16 %v624, %v618
  %v631 = vpack.c.b16 %v625, %v619
  %v632 = vpack.c.b16 %v626, %v620
  %v633 = vpack.c.b16 %v627, %v621
  %v634 = vpack.c.b16 %v628, %v622
  %v635 = vpack.c.b16 %v629, %v623
  %v731 = vunpack.c.l.b16 %v520
  %v732 = vunpack.c.l.b16 %v521
  %v733 = vunpack.c.l.b16 %v522
  %v734 = vunpack.c.l.b16 %v523
  %v735 = vunpack.c.l.b16 %v524
  %v736 = vunpack.c.l.b16 %v525
  %v737 = vunpack.c.l.b16 %v526
  %v738 = vunpack.c.l.b16 %v527
  %v739 = vunpack.c.l.b16 %v528
  %v740 = vunpack.c.l.b16 %v529
  %v741 = vunpack.c.l.b16 %v530
  %v742 = vunpack.c.l.b16 %v531
  %v743 = vunpack.c.l.b16 %v532
  %v744 = vunpack.c.l.b16 %v533
  %v745 = vunpack.c.l.b16 %v534
  %v746 = vunpack.c.l.b16 %v535
  %v747 = vunpack.c.l.b16 %v536
  %v748 = vunpack.c.l.b16 %v537
  %v749 = vunpack.c.l.b16 %v538
  %v750 = vunpack.c.l.b16 %v539
  %v751 = vunpack.c.l.b16 %v540
  %v752 = vunpack.c.l.b16 %v541
  %v753 = vunpack.c.l.b16 %v542
  %v754 = vunpack.c.l.b16 %v543
  %v755 = vunpack.c.l.b16 %v544
  %v756 = vunpack.c.l.b16 %v545
  %v757 = vunpack.c.l.b16 %v546
  %v758 = vunpack.c.l.b16 %v547
  %v759 = vunpack.c.l.b16 %v548
  %v760 = vunpack.c.l.b16 %v549
  %v761 = vunpack.c.l.b16 %v550
  %v762 = vunpack.c.l.b16 %v551
  %v763 = vunpack.c.l.b16 %v552
  %v764 = vunpack.c.l.b16 %v553
  %v765 = vunpack.c.l.b16 %v554
  %v766 = vunpack.c.l.b16 %v555
  %v767 = vunpack.c.l.b16 %v556
  %v768 = vunpack.c.l.b16 %v557
  %v769 = vunpack.c.l.b16 %v558
  %v770 = vunpack.c.l.b16 %v559
  %v771 = vunpack.c.l.b16 %v560
  %v772 = vunpack.c.l.b16 %v561
  %v773 = vunpack.c.l.b16 %v562
  %v774 = vunpack.c.l.b16 %v563
  %v775 = vunpack.c.l.b16 %v564
  %v776 = vunpack.c.l.b16 %v565
  %v777 = vunpack.c.l.b16 %v566
  %v778 = vunpack.c.l.b16 %v567
  %v779 = vunpack.c.l.b16 %v568
  %v780 = vunpack.c.l.b16 %v569
  %v781 = vunpack.c.l.b16 %v570
  %v782 = vunpack.c.l.b16 %v571
  %v783 = vunpack.c.l.b16 %v572
  %v784 = vunpack.c.l.b16 %v573
  %v785 = vunpack.c.l.b16 %v574
  %v786 = vunpack.c.l.b16 %v575
  %v787 = vunpack.c.l.b16 %v576
  %v788 = vunpack.c.l.b16 %v577
  %v789 = vunpack.c.l.b16 %v578
  %v790 = vunpack.c.l.b16 %v579
  %v791 = vunpack.c.l.b16 %v580
  %v792 = vunpack.c.l.b16 %v581
  %v793 = vunpack.c.l.b16 %v582
  %v794 = vunpack.c.l.b16 %v583
  %v795 = vunpack.c.l.b16 %v584
  %v796 = vunpack.c.l.b16 %v585
  %v797 = vunpack.c.l.b16 %v586
  %v798 = vunpack.c.l.b16 %v587
  %v799 = vunpack.c.l.b16 %v588
  %v800 = vunpack.c.l.b16 %v589
  %v801 = vunpack.c.l.b16 %v590
  %v802 = vunpack.c.l.b16 %v591
  %v803 = vunpack.c.l.b16 %v592
  %v804 = vunpack.c.l.b16 %v593
  %v805 = vunpack.c.l.b16 %v594
  %v806 = vunpack.c.l.b16 %v595
  %v807 = vunpack.c.l.b16 %v596
  %v808 = vunpack.c.l.b16 %v597
  %v809 = vunpack.c.l.b16 %v598
  %v810 = vunpack.c.l.b16 %v599
  %v811 = vunpack.c.l.b16 %v600
  %v812 = vunpack.c.l.b16 %v601
  %v813 = vunpack.c.l.b16 %v602
  %v814 = vunpack.c.l.b16 %v603
  %v815 = vunpack.c.l.b16 %v604
  %v816 = vunpack.c.l.b16 %v605
  %v817 = vunpack.c.l.b16 %v606
  %v818 = vunpack.c.l.b16 %v607
  %v819 = vunpack.c.l.b16 %v608
  %v820 = vunpack.c.l.b16 %v609
  %v821 = vpack.c.b16 %v732, %v731
  %v822 = vpack.c.b16 %v734, %v733
  %v823 = vpack.c.b16 %v736, %v735
  %v824 = vpack.c.b16 %v738, %v737
  %v825 = vpack.c.b16 %v740, %v739
  %v826 = vpack.c.b16 %v742, %v741
  %v827 = vpack.c.b16 %v744, %v743
  %v828 = vpack.c.b16 %v746, %v745
  %v829 = vpack.c.b16 %v748, %v747
  %v830 = vpack.c.b16 %v750, %v749
  %v831 = vpack.c.b16 %v752, %v751
  %v832 = vpack.c.b16 %v754, %v753
  %v833 = vpack.c.b16 %v756, %v755
  %v834 = vpack.c.b16 %v758, %v757
  %v835 = vpack.c.b16 %v760, %v759
  %v836 = vpack.c.b16 %v762, %v761
  %v837 = vpack.c.b16 %v764, %v763
  %v838 = vpack.c.b16 %v766, %v765
  %v839 = vpack.c.b16 %v768, %v767
  %v840 = vpack.c.b16 %v770, %v769
  %v841 = vpack.c.b16 %v772, %v771
  %v842 = vpack.c.b16 %v774, %v773
  %v843 = vpack.c.b16 %v776, %v775
  %v844 = vpack.c.b16 %v778, %v777
  %v845 = vpack.c.b16 %v780, %v779
  %v846 = vpack.c.b16 %v782, %v781
  %v847 = vpack.c.b16 %v784, %v783
  %v848 = vpack.c.b16 %v786, %v785
  %v849 = vpack.c.b16 %v788, %v787
  %v850 = vpack.c.b16 %v790, %v789
  %v851 = vpack.c.b16 %v792, %v791
  %v852 = vpack.c.b16 %v794, %v793
  %v853 = vpack.c.b16 %v796, %v795
  %v854 = vpack.c.b16 %v798, %v797
  %v855 = vpack.c.b16 %v800, %v799
  %v856 = vpack.c.b16 %v802, %v801
  %v857 = vpack.c.b16 %v804, %v803
  %v858 = vpack.c.b16 %v806, %v805
  %v859 = vpack.c.b16 %v808, %v807
  %v860 = vpack.c.b16 %v810, %v809
  %v861 = vpack.c.b16 %v812, %v811
  %v862 = vpack.c.b16 %v814, %v813
  %v863 = vpack.c.b16 %v816, %v815
  %v864 = vpack.c.b16 %v818, %v817
  %v865 = vpack.c.b16 %v820, %v819
  %vm910 = vcmask 605184
  %v912 = vsel %vm910, %v635, 0
  %vm914 = vcmask 1044480
  %v916 = vsel %vm914, %v865, 0
  %918 = vmatpush.bf16.msra.mxu0 %v828
  %919 = vmatpush.bf16.msra.mxu0 %v827
  %920 = vmatpush.bf16.msra.mxu0 %v826
  %921 = vmatpush.bf16.msra.mxu0 %v825
  %922 = vmatpush.bf16.msra.mxu0 %v824
  %923 = vmatpush.bf16.msra.mxu0 %v823
  %924 = vmatpush.bf16.msra.mxu0 %v822
  %925 = vmatpush.bf16.msra.mxu0 %v821
  %926 = vmatmul.bf16.gmra.mxu0 %v630
  %v927 = vpop.f32.mrf.mxu0
  %v928 = vadd.f32 %v611, %v927
  %v929 = vpop.f32.mrf.mxu0
  %v930 = vadd.f32 %v611, %v929
  %931 = vdwg.mxu0
  %932 = vmatpush.bf16.msra.mxu0 %v836
  %933 = vmatpush.bf16.msra.mxu0 %v835
  %934 = vmatpush.bf16.msra.mxu0 %v834
  %935 = vmatpush.bf16.msra.mxu0 %v833
  %936 = vmatpush.bf16.msra.mxu0 %v832
  %937 = vmatpush.bf16.msra.mxu0 %v831
  %938 = vmatpush.bf16.msra.mxu0 %v830
  %939 = vmatpush.bf16.msra.mxu0 %v829
  %940 = vmatmul.bf16.gmra.mxu0 %v631
  %v941 = vpop.f32.mrf.mxu0
  %v942 = vadd.f32 %v928, %v941
  %v943 = vpop.f32.mrf.mxu0
  %v944 = vadd.f32 %v930, %v943
  %945 = vdwg.mxu0
  %946 = vmatpush.bf16.msra.mxu0 %v844
  %947 = vmatpush.bf16.msra.mxu0 %v843
  %948 = vmatpush.bf16.msra.mxu0 %v842
  %949 = vmatpush.bf16.msra.mxu0 %v841
  %950 = vmatpush.bf16.msra.mxu0 %v840
  %951 = vmatpush.bf16.msra.mxu0 %v839
  %952 = vmatpush.bf16.msra.mxu0 %v838
  %953 = vmatpush.bf16.msra.mxu0 %v837
  %954 = vmatmul.bf16.gmra.mxu0 %v632
  %v955 = vpop.f32.mrf.mxu0
  %v956 = vadd.f32 %v942, %v955
  %v957 = vpop.f32.mrf.mxu0
  %v958 = vadd.f32 %v944, %v957
  %959 = vdwg.mxu0
  %960 = vmatpush.bf16.msra.mxu0 %v852
  %961 = vmatpush.bf16.msra.mxu0 %v851
  %962 = vmatpush.bf16.msra.mxu0 %v850
  %963 = vmatpush.bf16.msra.mxu0 %v849
  %964 = vmatpush.bf16.msra.mxu0 %v848
  %965 = vmatpush.bf16.msra.mxu0 %v847
  %966 = vmatpush.bf16.msra.mxu0 %v846
  %967 = vmatpush.bf16.msra.mxu0 %v845
  %968 = vmatmul.bf16.gmra.mxu0 %v633
  %v969 = vpop.f32.mrf.mxu0
  %v970 = vadd.f32 %v956, %v969
  %v971 = vpop.f32.mrf.mxu0
  %v972 = vadd.f32 %v958, %v971
  %973 = vdwg.mxu0
  %974 = vmatpush.bf16.msra.mxu0 %v860
  %975 = vmatpush.bf16.msra.mxu0 %v859
  %976 = vmatpush.bf16.msra.mxu0 %v858
  %977 = vmatpush.bf16.msra.mxu0 %v857
  %978 = vmatpush.bf16.msra.mxu0 %v856
  %979 = vmatpush.bf16.msra.mxu0 %v855
  %980 = vmatpush.bf16.msra.mxu0 %v854
  %981 = vmatpush.bf16.msra.mxu0 %v853
  %982 = vmatmul.bf16.gmra.mxu0 %v634
  %v983 = vpop.f32.mrf.mxu0
  %v984 = vadd.f32 %v970, %v983
  %v985 = vpop.f32.mrf.mxu0
  %v986 = vadd.f32 %v972, %v985
  %987 = vdwg.mxu0
  %988 = vmatpush.bf16.msra.mxu0 0
  %989 = vmatpush.bf16.msra.mxu0 0
  %990 = vmatpush.bf16.msra.mxu0 0
  %991 = vmatpush.bf16.msra.mxu0 %v916
  %992 = vmatpush.bf16.msra.mxu0 %v864
  %993 = vmatpush.bf16.msra.mxu0 %v863
  %994 = vmatpush.bf16.msra.mxu0 %v862
  %995 = vmatpush.bf16.msra.mxu0 %v861
  %996 = vmatmul.bf16.gmra.mxu0 %v912
  %v997 = vpop.f32.mrf.mxu0
  %v998 = vadd.f32 %v984, %v997
  %v999 = vpop.f32.mrf.mxu0
  %v1000 = vadd.f32 %v986, %v999
  %1001 = vdwg.mxu0
  %v1002 = vmax.f32 %v510, 0.0
  %v1003 = vmax.f32 %v512, 0.0
  %v1004 = vmax.f32 %v998, 0.0
  %v1005 = vmax.f32 %v1000, 0.0
  %v1006 = vld [vmem:[%s5 + $0x3] sm:$0x1]
  %v1007 = vld [vmem:[%s5 + $0x4] sm:$0x1]
  %v1008 = vld [vmem:[%s5 + $0x5] sm:$0x1]
  %v1009 = vperm.slane %v1006, 0
  %v1010 = vmul.f32 %v1002, %v1009
  %v1011 = vmul.f32 %v1003, %v1009
  %v1012 = vperm.slane %v1007, 0
  %v1013 = vmul.f32 %v1004, %v1012
  %v1014 = vmul.f32 %v1005, %v1012
  %v1015 = vadd.f32 %v1010, %v1013
  %v1016 = vadd.f32 %v1011, %v1014
  %vm1017 = vcmask 490496
  %v1018 = vsel %vm1017, %v1015, 0.0
  %1019 = vadd.xlane.f32.xlu0 %v1018
  %v1020 = vpop.xlane.xlu0 %1019
  %v1021 = vsel %vm1017, %v1016, 0.0
  %1022 = vadd.xlane.f32.xlu0 %v1021
  %v1023 = vpop.xlane.xlu0 %1022
  %v1024 = vperm.slane %v1008, 0
  %v1025 = vadd.f32 %v1020, %v1024
  %v1026 = vadd.f32 %v1023, %v1024
  %v1027 = vxor.u32 %v1025, 2147483648
  %v1028 = vxor.u32 %v1026, 2147483648
  %v1029 = vmul.f32 %v1027, 1.442695
  %v1030 = vpow.pop %v1029
  %v1031 = vmul.f32 %v1028, 1.442695
  %v1032 = vpow.pop %v1031
  %v1033 = vadd.f32 %v1030, 1.0
  %v1034 = vadd.f32 %v1032, 1.0
  %v1035 = vrcp.pop %v1033
  %v1036 = vmul.f32 %v1033, %v1035
  %v1037 = vsub.f32 1.0, %v1036
  %v1038 = vmul.f32 %v1035, %v1037
  %v1039 = vadd.f32 %v1035, %v1038
  %vm1040 = vweird.f32 %v1033
  %vm1041 = vweird.f32 %v1035
  %vm1042 = vmor %vm1040, %vm1041
  %v1043 = vsel %vm1042, %v1035, %v1039
  %v1044 = vand.u32 2147483647, %v1033
  %vm1045 = vcmp.eq.f32.partialorder %v1044, 8.507059e+37
  %v1046 = vand.u32 %v1033, 2147483648
  %v1047 = vor.u32 1.1754944e-38, %v1046
  %v1048 = vsel %vm1045, %v1047, %v1043
  %v1049 = vmul.f32 1.0, %v1048
  %v1050 = vrcp.pop %v1034
  %v1051 = vmul.f32 %v1034, %v1050
  %v1052 = vsub.f32 1.0, %v1051
  %v1053 = vmul.f32 %v1050, %v1052
  %v1054 = vadd.f32 %v1050, %v1053
  %vm1055 = vweird.f32 %v1034
  %vm1056 = vweird.f32 %v1050
  %vm1057 = vmor %vm1055, %vm1056
  %v1058 = vsel %vm1057, %v1050, %v1054
  %v1059 = vand.u32 2147483647, %v1034
  %vm1060 = vcmp.eq.f32.partialorder %v1059, 8.507059e+37
  %v1061 = vand.u32 %v1034, 2147483648
  %v1062 = vor.u32 1.1754944e-38, %v1061
  %v1063 = vsel %vm1060, %v1062, %v1058
  %v1064 = vmul.f32 1.0, %v1063
  %vm1065 = vcmask 7168
  %1066 = vst.msk [vmem:[%s6] sm:$0xff] %vm1065, %v1049
  %1067 = vst.msk [vmem:[%s6 + $0x8] sm:$0xff] %vm1065, %v1064
  // Predicated region
  $region26: #{cnn_forward.1} parent=0 // pred_check
    _
  $region27: #{cnn_forward.1} parent=0 // pred_check_branch
    %1069 = sbr.rel (0) target = $region29
  $region28: #{cnn_forward.1} parent=0 // pred_region
    _
  $region29: #{cnn_forward.1} parent=0 // pred_fallthru
    _
  // Predicated region
  $region30: #{cnn_forward.1} parent=0 // pred_check
    _
  $region31: #{cnn_forward.1} parent=0 // pred_check_branch
    %1071 = sbr.rel (0) target = $region33
  $region32: #{cnn_forward.1} parent=0 // pred_region
    _
  $region33: #{cnn_forward.1} parent=0 // pred_fallthru
    _

</llo_original>
